<compile_context>
chip_gen: v6e
topology: v6e:2x2x1
jax: 0.10.0
libtpu: 0.0.40
codegen_flags: <defaults>
</compile_context>

<pallas_src>
import math

import jax
import jax.numpy as jnp
from jax.experimental import pallas as pl
from jax.experimental.pallas import tpu as pltpu


def _round_up(n, m):
    return ((n + m - 1) // m) * m


def _make_kernel(dim, half_dim, scale, k):
    """Returns a kernel that writes a (tb, k*dim) tile of the embedding."""

    def kernel(x_ref, out_ref):
        tb = x_ref.shape[0]
        if k > 1:
            # Packed layout: lanes [j*dim, (j+1)*dim) of each output row hold
            # the embedding of packed batch element j.  Broadcast x densely
            # across all k*dim (=128) lanes so sin/cos run at full lane
            # occupancy and the store is a single unmasked full-width vst.
            xt = x_ref[...]                                           # (tb, k)
            x_b = jnp.concatenate(
                [jnp.broadcast_to(xt[:, j:j + 1], (tb, dim)) for j in range(k)],
                axis=-1)                                              # (tb, k*dim)
            lane = jax.lax.broadcasted_iota(jnp.int32, (1, k * dim), 1)
            c = lane % dim                         # column within one embedding
            is_sin = c < half_dim
            c_half = jnp.where(is_sin, c, c - half_dim).astype(jnp.float32)
            freqs = jnp.exp(c_half * (-scale))                        # (1, k*dim)
            ang = x_b * freqs                                         # (tb, k*dim)
            out_ref[...] = jnp.where(
                is_sin, jnp.sin(ang), jnp.cos(ang)).astype(out_ref.dtype)
        else:
            col = jax.lax.broadcasted_iota(
                jnp.int32, (1, half_dim), 1).astype(jnp.float32)
            freqs = jnp.exp(col * (-scale))                           # (1, half_dim)
            ang = x_ref[...] * freqs                                  # (tb, half_dim)
            if half_dim % 128 == 0:
                # Both stores are lane-aligned and unmasked; no concat needed.
                out_ref[:, :half_dim] = jnp.sin(ang).astype(out_ref.dtype)
                out_ref[:, half_dim:] = jnp.cos(ang).astype(out_ref.dtype)
            else:
                out_ref[...] = jnp.concatenate(
                    [jnp.sin(ang), jnp.cos(ang)], axis=-1).astype(out_ref.dtype)

    return kernel


def sinusoidal_pos_emb(x, dim, *, out_dtype=jnp.float32, vmem_budget_bytes=4 << 20):
    """x: (B,) timesteps -> (B, dim) sinusoidal embedding (torch SinusoidalPosEmb)."""
    assert dim % 2 == 0, "SinusoidalPosEmb requires even dim"
    assert dim >= 4, "dim must be >= 4 (dim == 2 divides by zero in the scale)"
    half_dim = dim // 2
    scale = math.log(10000.0) / (half_dim - 1)

    B = x.shape[0]
    xf = x.astype(jnp.float32)

    # Row packing: for dim < 128 pack k batch rows per 128-lane output row so
    # the output store is lane-dense.  (B//k, k*dim) is a free row-major
    # reshape of (B, dim), so no extra data movement outside the kernel.
    if dim < 128 and 128 % dim == 0 and B % (128 // dim) == 0:
        k = 128 // dim
    else:
        k = 1
    R = B // k                 # rows the kernel sees
    W = k * dim                # output row width (128 when packed)
    x_in = xf.reshape(R, k)

    # Batch tile from a VMEM budget; double-buffered tiles stay far under the
    # scoped VMEM limit on every generation (incl. v7x's 64 MiB physical).
    tb = max(8, (vmem_budget_bytes // (W * 4)) // 8 * 8)
    if R > 8:
        # Guarantee >= 2 grid blocks so "parallel" can shard across v7x's 2 TCs.
        tb = min(tb, _round_up(pl.cdiv(R, 2), 8))
    if tb >= R:
        tb = R                 # single full-extent block
    grid = (pl.cdiv(R, tb),)   # partial final block is clipped by Pallas.

    cost = pl.CostEstimate(
        flops=2 * B * half_dim,
        transcendentals=B * dim * (2 if k > 1 else 1),
        bytes_accessed=B * 4 + B * dim * 4,
    )

    out = pl.pallas_call(
        _make_kernel(dim, half_dim, scale, k),
        out_shape=jax.ShapeDtypeStruct((R, W), out_dtype),
        grid=grid,
        in_specs=[pl.BlockSpec((tb, k), lambda i: (i, 0))],
        out_specs=pl.BlockSpec((tb, W), lambda i: (i, 0)),
        compiler_params=pltpu.CompilerParams(
            dimension_semantics=("parallel",),
        ),
        cost_estimate=cost,
    )(x_in)

    return out.reshape(B, dim)


def _reference(x, dim):
    half_dim = dim // 2
    emb = math.log(10000.0) / (half_dim - 1)
    emb = jnp.exp(jnp.arange(half_dim, dtype=jnp.float32) * -emb)
    emb = x.astype(jnp.float32)[:, None] * emb[None, :]
    return jnp.concatenate([jnp.sin(emb), jnp.cos(emb)], axis=-1)


if __name__ == "__main__":
    # Tolerance note: freqs/sin/cos are evaluated in-kernel (Mosaic EUP/VPU)
    # while the reference goes through XLA; at angles up to ~1000 a 1-ulp
    # difference in exp(-c*scale) shifts the angle by up to ~1e-4, so compare
    # with atol=2e-4 (values are O(1)).
    def check(B, dim, key):
        x = jax.random.uniform(key, (B,), jnp.float32, 0.0, 1000.0)
        out = jax.block_until_ready(sinusoidal_pos_emb(x, dim))
        ref = _reference(x, dim)
        assert out.shape == (B, dim) and out.dtype == jnp.float32
        err = float(jnp.max(jnp.abs(out - ref)))
        assert jnp.allclose(out, ref, atol=2e-4, rtol=1e-4), (B, dim, err)

    check(8, 32, jax.random.PRNGKey(0))    # packed lane-dense path (k=4), single block
    check(64, 32, jax.random.PRNGKey(1))   # packed path, multi-block grid (megacore split)
    check(13, 32, jax.random.PRNGKey(2))   # fallback path (B % k != 0), partial last block
    check(16, 256, jax.random.PRNGKey(3))  # half_dim % 128 == 0 -> direct slice stores

    print("KERNEL_OK")
</pallas_src>

<mosaic_0001>
module attributes {stable_mosaic.version = 11 : i64} {
  func.func @kernel(%arg0: i32, %arg1: memref<2x4xf32, #tpu.memory_space<vmem>>, %arg2: memref<2x128xf32, #tpu.memory_space<vmem>>) attributes {dimension_semantics = [#tpu.dimension_semantics<parallel>], iteration_bounds = array<i64: 1>, scalar_prefetch = 0 : i64, scratch_operands = 0 : i64, tpu.core_type = #tpu.core_type<tc>, window_params = [{transform_indices = @transform_0, window_bounds = array<i64: 2, 4>}, {transform_indices = @transform_1, window_bounds = array<i64: 2, 128>}]} {
    %c0 = arith.constant 0 : index
    %c0_0 = arith.constant 0 : index
    %0 = vector.load %arg1[%c0, %c0_0] : memref<2x4xf32, #tpu.memory_space<vmem>>, vector<2x4xf32>
    %1 = vector.extract_strided_slice %0 {offsets = [0, 0], sizes = [2, 1], strides = [1, 1]} : vector<2x4xf32> to vector<2x1xf32>
    %2 = vector.shape_cast %1 : vector<2x1xf32> to vector<2x1xf32>
    %3 = vector.broadcast %2 : vector<2x1xf32> to vector<2x32xf32>
    %4 = vector.extract_strided_slice %0 {offsets = [0, 1], sizes = [2, 1], strides = [1, 1]} : vector<2x4xf32> to vector<2x1xf32>
    %5 = vector.shape_cast %4 : vector<2x1xf32> to vector<2x1xf32>
    %6 = vector.broadcast %5 : vector<2x1xf32> to vector<2x32xf32>
    %7 = vector.extract_strided_slice %0 {offsets = [0, 2], sizes = [2, 1], strides = [1, 1]} : vector<2x4xf32> to vector<2x1xf32>
    %8 = vector.shape_cast %7 : vector<2x1xf32> to vector<2x1xf32>
    %9 = vector.broadcast %8 : vector<2x1xf32> to vector<2x32xf32>
    %10 = vector.extract_strided_slice %0 {offsets = [0, 3], sizes = [2, 1], strides = [1, 1]} : vector<2x4xf32> to vector<2x1xf32>
    %11 = vector.shape_cast %10 : vector<2x1xf32> to vector<2x1xf32>
    %12 = vector.broadcast %11 : vector<2x1xf32> to vector<2x32xf32>
    %13 = tpu.concatenate %3, %6, %9, %12 in 1 : vector<2x32xf32>, vector<2x32xf32>, vector<2x32xf32>, vector<2x32xf32> -> vector<2x128xf32>
    %14 = tpu.iota {dimensions = array<i32: 1>} : vector<1x128xi32>
    %c32_i32 = arith.constant 32 : i32
    %c0_i32 = arith.constant 0 : i32
    %15 = arith.cmpi eq, %c32_i32, %c0_i32 : i32
    %c1_i32 = arith.constant 1 : i32
    %16 = arith.select %15, %c1_i32, %c32_i32 : i32
    %17 = vector.broadcast %16 : i32 to vector<1x128xi32>
    %18 = arith.remsi %14, %17 : vector<1x128xi32>
    %c0_i32_1 = arith.constant 0 : i32
    %19 = vector.broadcast %c0_i32_1 : i32 to vector<1x128xi32>
    %20 = arith.cmpi ne, %18, %19 : vector<1x128xi32>
    %c0_i32_2 = arith.constant 0 : i32
    %21 = vector.broadcast %c0_i32_2 : i32 to vector<1x128xi32>
    %22 = arith.cmpi slt, %18, %21 : vector<1x128xi32>
    %c0_i32_3 = arith.constant 0 : i32
    %23 = arith.cmpi slt, %16, %c0_i32_3 : i32
    %24 = vector.broadcast %23 : i1 to vector<1x128xi1>
    %25 = vector.broadcast %24 : vector<1x128xi1> to vector<1x128xi1>
    %26 = arith.xori %22, %25 : vector<1x128xi1>
    %27 = arith.andi %26, %20 : vector<1x128xi1>
    %28 = vector.broadcast %16 : i32 to vector<1x128xi32>
    %29 = arith.addi %18, %28 : vector<1x128xi32>
    %30 = arith.select %27, %29, %18 : vector<1x128xi1>, vector<1x128xi32>
    %c16_i32 = arith.constant 16 : i32
    %31 = vector.broadcast %c16_i32 : i32 to vector<1x128xi32>
    %32 = arith.cmpi slt, %30, %31 : vector<1x128xi32>
    %c16_i32_4 = arith.constant 16 : i32
    %33 = vector.broadcast %c16_i32_4 : i32 to vector<1x128xi32>
    %34 = arith.subi %30, %33 : vector<1x128xi32>
    %35 = arith.select %32, %30, %34 : vector<1x128xi1>, vector<1x128xi32>
    %36 = arith.sitofp %35 : vector<1x128xi32> to vector<1x128xf32>
    %cst = arith.constant -0.614022672 : f32
    %37 = vector.broadcast %cst : f32 to vector<1x128xf32>
    %38 = arith.mulf %36, %37 : vector<1x128xf32>
    %39 = math.exp %38 : vector<1x128xf32>
    %40 = vector.broadcast %39 : vector<1x128xf32> to vector<2x128xf32>
    %41 = arith.mulf %13, %40 : vector<2x128xf32>
    %42 = math.sin %41 : vector<2x128xf32>
    %43 = math.cos %41 : vector<2x128xf32>
    %44 = vector.shape_cast %32 : vector<1x128xi1> to vector<1x128xi1>
    %45 = vector.broadcast %44 : vector<1x128xi1> to vector<2x128xi1>
    %46 = arith.select %45, %42, %43 : vector<2x128xi1>, vector<2x128xf32>
    %c0_5 = arith.constant 0 : index
    %c0_6 = arith.constant 0 : index
    %47 = vector.load %arg2[%c0_5, %c0_6] : memref<2x128xf32, #tpu.memory_space<vmem>>, vector<2x128xf32>
    tpu.vector_store %arg2[%c0_5, %c0_6], %46 {strides = array<i32>} : memref<2x128xf32, #tpu.memory_space<vmem>>, vector<2x128xf32>,
    return
  }
  func.func @transform_0(%arg0: i32) -> (i32, i32) {
    %c0_i32 = arith.constant 0 : i32
    %c0_i32_0 = arith.constant 0 : i32
    return %arg0, %c0_i32 : i32, i32
  }
  func.func @transform_1(%arg0: i32) -> (i32, i32) {
    %c0_i32 = arith.constant 0 : i32
    %c0_i32_0 = arith.constant 0 : i32
    return %arg0, %c0_i32 : i32, i32
  }
}

</mosaic_0001>

<llo_original>
// kernel: tpu_custom_call.1
$region0: #{tpu_custom_call.1}
  #allocation0 [shape = 'u32[]', space=smem, size = 0x4, offset = 0x4, fixed_abs, tag = 'smem constant byte address 0x4 - core index']
  #allocation1 [shape = 'u32[144,128]{1,0:T(1,128)}', space=vmem, size = 0x12000, scoped, tag = 'internal scratch']
  %s0 = inlined_call_operand.hbm [shape: f32[2,4], index: 0, kind: input, shape index: {}]
  %s1 = inlined_call_operand.hbm [shape: f32[2,128], index: 1, kind: output, shape index: {}]
  %s2 = sld [smem:[#allocation0]]
  $region18: #{tpu_custom_call.1} parent=0
    _
  %s4 = ssub.s32 1, %s2
  %s5 = scalar_select 0, %s4, %s2
  $region1: #{tpu_custom_call.1} parent=0
    #allocation2 [shape = 'u8[1024]{0}', space=vmem, size = 0x400, scoped, tag = 'input window, operand 0, single buffered']
    #allocation3 [shape = 's32[1]{0}', space=sflag, size = 0x4, scoped, tag = 'scoped memory for tpu_custom_call.1']
    #allocation4 [shape = 's32[1]{0}', space=sflag, size = 0x4, scoped, tag = 'scoped memory for tpu_custom_call.1']
    #allocation5 [shape = 'u8[1024]{0}', space=vmem, size = 0x400, scoped, tag = 'output window, operand 0, single buffered']
    %6 = vsyncpa [#allocation3], 0
    %7 = vsyncpa [#allocation4], 0
    // Predicated region
    $region2: #{tpu_custom_call.1} parent=1 // pred_check
      _
    $region3: #{tpu_custom_call.1} parent=1 // pred_check_branch
      %9 = sbr.rel (0) target = $region5
    $region4: #{tpu_custom_call.1} parent=1 // pred_region
      %s11 = ssub.s32 32, 32
      %12 = vsyncadd [#allocation3], %s11
      %s14 = sshll.u32 [#allocation2], 4
      %s15 = int_to_ptr.vmem [resolvable:$true] %s14
      %17 = dma.hbm_to_vmem [thread:$0]  %s0, 32, %s15, [#allocation3]
    $region5: #{tpu_custom_call.1} parent=1 // pred_fallthru
      _
    // Predicated region
    $region6: #{tpu_custom_call.1} parent=1 // pred_check
      _
    $region7: #{tpu_custom_call.1} parent=1 // pred_check_branch
      %19 = sbr.rel (0) target = $region9
    $region8: #{tpu_custom_call.1} parent=1 // pred_region
      %20 = dma.done [#allocation3], 32
    $region9: #{tpu_custom_call.1} parent=1 // pred_fallthru
      _
    %v21 = vld [vmem:[#allocation2] sm:$0x3]
    %23 = vset.pattern.permute.xlu0 0
    %24 = vperm.xlu0 %23, %v21
    %v25 = vpop.permute.xlu0 %24
    %27 = vset.pattern.permute.xlu0 1
    %28 = vperm.xlu0 %27, %v21
    %v29 = vpop.permute.xlu0 %28
    %31 = vset.pattern.permute.xlu0 2
    %32 = vperm.xlu0 %31, %v21
    %v33 = vpop.permute.xlu0 %32
    %35 = vset.pattern.permute.xlu0 3
    %36 = vperm.xlu0 %35, %v21
    %v37 = vpop.permute.xlu0 %36
    %vm39 = vcmask 261120
    %v40 = vsel %vm39, %v25, %v29
    %vm41 = vcmask 523264
    %v42 = vsel %vm41, %v40, %v33
    %vm43 = vcmask 785408
    %v44 = vsel %vm43, %v42, %v37
    %v45 = vlaneseq
    %v46 = vand.u32 %v45, 127
    %vm47 = vcmp.lt.s32.totalorder %v46, 0
    %v48 = vsub.s32 0, %v46
    %v49 = vsel %vm47, %v48, %v46
    %v50 = vshrl.u32 %v49, 5
    %v51 = vand.u32 %v49, 31
    %v52 = vsub.s32 0, %v51
    %v53 = vsel %vm47, %v52, %v51
    %vm54 = vcmp.ne.s32.totalorder %v53, 0
    %vm55 = vcmp.lt.s32.totalorder %v53, 0
    %vm56 = vmand %vm55, %vm54
    %v57 = vadd.s32 %v53, 32
    %v58 = vsel %vm56, %v57, %v53
    %vm59 = vcmp.lt.s32.totalorder %v58, 16
    %v60 = vsub.s32 %v58, 16
    %v61 = vsel %vm59, %v58, %v60
    %v62 = vcvt.s32.f32 %v61
    %v63 = vmul.f32 %v62, -0.6140227
    %v64 = vmul.f32 %v63, 1.442695
    %v65 = vpow.pop %v64
    %v66 = vmul.f32 %v44, %v65
    %v67 = vand.u32 2147483647, %v66
    %vm68 = vcmp.le.f32.partialorder %v67, 0.7853982
    %vm69 = vcmp.lt.s32.totalorder %v66, 0
    %v70 = vand.u32 %v66, 2139095040
    %v71 = vshrl.u32 %v70, 23
    %v72 = vsub.s32 %v71, 127
    %v73 = vand.u32 2147483647, %v66
    %v74 = vand.u32 %v73, 8388607
    %v75 = vor.u32 %v74, 8388608
    %v76 = vsub.s32 0, %v75
    %v77 = vadd.s32 %v72, 1
    %vm78 = vcmp.gt.s32.totalorder %v77, 0
    %v79 = vsel %vm78, %v77, 0
    %v80 = vshrl.u32 %v79, 5
    %v81 = vand.u32 %v79, 31
    %v82 = vsub.s32 32, %v81
    %v83 = vshrl.u32 683565275, %v82
    %v84 = vshll.u32 683565275, %v81
    %v85 = vshrl.u32 2475754826, %v82
    %v86 = vor.u32 %v84, %v85
    %v87 = vshll.u32 2475754826, %v81
    %v88 = vshrl.u32 2131351028, %v82
    %v89 = vor.u32 %v87, %v88
    %v90 = vshll.u32 2131351028, %v81
    %v91 = vshrl.u32 2102212464, %v82
    %v92 = vor.u32 %v90, %v91
    %v93 = vshll.u32 2102212464, %v81
    %v94 = vshrl.u32 920167782, %v82
    %v95 = vor.u32 %v93, %v94
    %v96 = vshll.u32 920167782, %v81
    %v97 = vshrl.u32 1326507024, %v82
    %v98 = vor.u32 %v96, %v97
    %vm99 = vcmp.lt.s32.totalorder %v80, 1
    %vm100 = vcmp.lt.s32.totalorder %v80, 2
    %vm101 = vcmp.lt.s32.totalorder %v80, 3
    %vm102 = vcmp.lt.s32.totalorder %v80, 4
    %v103 = vsel %vm99, %v83, %v86
    %v104 = vsel %vm102, %v92, 2102212464
    %v105 = vsel %vm101, %v89, %v104
    %v106 = vsel %vm100, %v103, %v105
    %v107 = vsel %vm99, %v86, %v89
    %v108 = vsel %vm102, %v95, 920167782
    %v109 = vsel %vm101, %v92, %v108
    %v110 = vsel %vm100, %v107, %v109
    %v111 = vsel %vm99, %v89, %v92
    %v112 = vsel %vm102, %v98, 1326507024
    %v113 = vsel %vm101, %v95, %v112
    %v114 = vsel %vm100, %v111, %v113
    %v115 = vshll.u32 %v75, 8
    %v116 = vmul.u32.u64.compose %v115, %v114
    %v117 = vextract.low.u32 %v116
    %v118 = vextract.high.u32 %v116
    %v119 = vmul.u32.u64.compose %v115, %v110
    %v120 = vextract.low.u32 %v119
    %v121 = vextract.high.u32 %v119
    %v122 = vmul.u32 %v115, %v106
    %v123 = vadd.s32 %v118, %v120
    %vm124 = vc.u32 %v118, %v120
    %v125 = vadd.s32 %v121, 1
    %v126 = vsel %vm124, %v125, %v121
    %v127 = vadd.s32 %v122, %v126
    %v128 = vadd.s32 %v127, 536870912
    %v129 = vshrl.u32 %v128, 30
    %v130 = vshll.u32 %v129, 30
    %v131 = vsub.s32 %v127, %v130
    %vm132 = vcmp.lt.s32.totalorder %v131, 0
    %v133 = vsub.s32 0, %v131
    %v134 = vsel %vm132, %v133, %v131
    %v135 = vclz %v134
    %v136 = vsub.s32 %v135, 2
    %vm137 = vcmp.gt.s32.totalorder 0, %v136
    %v138 = vsel %vm137, 0, %v136
    %v139 = vsub.s32 32, %v138
    %v140 = vshll.u32 %v131, %v138
    %v141 = vshrl.u32 %v123, %v139
    %v142 = vor.u32 %v140, %v141
    %v143 = vsub.s32 4294967266, %v138
    %v144 = vadd.s32 %v143, 127
    %v145 = vshll.u32 %v144, 23
    %v146 = vor.u32 4788187, %v145
    %v147 = vand.u32 2147483647, %v146
    %v149 = vcvt.s32.f32 %v142
    %v150 = vmul.f32 %v149, %v147
    %v151 = vxor.u32 %v150, 2147483648
    %v152 = vsel %vm69, %v151, %v150
    %v153 = vsub.s32 4, %v129
    %v154 = vsel %vm69, %v153, %v129
    %v155 = vsel %vm68, %v66, %v152
    %v156 = vsel %vm68, 0, %v154
    %v157 = vcosq.f32.pop %v155
    %v158 = vsinq.f32.pop %v155
    %vm159 = vweird.f32 %v66
    %v160 = vadd.s32 %v156, 3
    %v161 = vand.u32 %v160, 3
    %vm162 = vcmp.lt.s32.totalorder %v161, 2
    %vm163 = vcmp.eq.s32.totalorder %v161, 0
    %v164 = vxor.u32 %v158, 2147483648
    %v165 = vsel %vm163, %v157, %v164
    %vm166 = vcmp.eq.s32.totalorder %v161, 2
    %v167 = vxor.u32 %v157, 2147483648
    %v168 = vsel %vm166, %v167, %v158
    %v169 = vsel %vm162, %v165, %v168
    %v170 = vsel %vm159, nan, %v169
    %v171 = vand.u32 2147483647, %v66
    %vm172 = vcmp.le.f32.partialorder %v171, 0.7853982
    %vm173 = vcmp.lt.s32.totalorder %v66, 0
    %v174 = vand.u32 %v66, 2139095040
    %v175 = vshrl.u32 %v174, 23
    %v176 = vsub.s32 %v175, 127
    %v177 = vand.u32 2147483647, %v66
    %v178 = vand.u32 %v177, 8388607
    %v179 = vor.u32 %v178, 8388608
    %v180 = vsub.s32 0, %v179
    %v181 = vadd.s32 %v176, 1
    %vm182 = vcmp.gt.s32.totalorder %v181, 0
    %v183 = vsel %vm182, %v181, 0
    %v184 = vshrl.u32 %v183, 5
    %v185 = vand.u32 %v183, 31
    %v186 = vsub.s32 32, %v185
    %v187 = vshrl.u32 683565275, %v186
    %v188 = vshll.u32 683565275, %v185
    %v189 = vshrl.u32 2475754826, %v186
    %v190 = vor.u32 %v188, %v189
    %v191 = vshll.u32 2475754826, %v185
    %v192 = vshrl.u32 2131351028, %v186
    %v193 = vor.u32 %v191, %v192
    %v194 = vshll.u32 2131351028, %v185
    %v195 = vshrl.u32 2102212464, %v186
    %v196 = vor.u32 %v194, %v195
    %v197 = vshll.u32 2102212464, %v185
    %v198 = vshrl.u32 920167782, %v186
    %v199 = vor.u32 %v197, %v198
    %v200 = vshll.u32 920167782, %v185
    %v201 = vshrl.u32 1326507024, %v186
    %v202 = vor.u32 %v200, %v201
    %vm203 = vcmp.lt.s32.totalorder %v184, 1
    %vm204 = vcmp.lt.s32.totalorder %v184, 2
    %vm205 = vcmp.lt.s32.totalorder %v184, 3
    %vm206 = vcmp.lt.s32.totalorder %v184, 4
    %v207 = vsel %vm203, %v187, %v190
    %v208 = vsel %vm206, %v196, 2102212464
    %v209 = vsel %vm205, %v193, %v208
    %v210 = vsel %vm204, %v207, %v209
    %v211 = vsel %vm203, %v190, %v193
    %v212 = vsel %vm206, %v199, 920167782
    %v213 = vsel %vm205, %v196, %v212
    %v214 = vsel %vm204, %v211, %v213
    %v215 = vsel %vm203, %v193, %v196
    %v216 = vsel %vm206, %v202, 1326507024
    %v217 = vsel %vm205, %v199, %v216
    %v218 = vsel %vm204, %v215, %v217
    %v219 = vshll.u32 %v179, 8
    %v220 = vmul.u32.u64.compose %v219, %v218
    %v221 = vextract.low.u32 %v220
    %v222 = vextract.high.u32 %v220
    %v223 = vmul.u32.u64.compose %v219, %v214
    %v224 = vextract.low.u32 %v223
    %v225 = vextract.high.u32 %v223
    %v226 = vmul.u32 %v219, %v210
    %v227 = vadd.s32 %v222, %v224
    %vm228 = vc.u32 %v222, %v224
    %v229 = vadd.s32 %v225, 1
    %v230 = vsel %vm228, %v229, %v225
    %v231 = vadd.s32 %v226, %v230
    %v232 = vadd.s32 %v231, 536870912
    %v233 = vshrl.u32 %v232, 30
    %v234 = vshll.u32 %v233, 30
    %v235 = vsub.s32 %v231, %v234
    %vm236 = vcmp.lt.s32.totalorder %v235, 0
    %v237 = vsub.s32 0, %v235
    %v238 = vsel %vm236, %v237, %v235
    %v239 = vclz %v238
    %v240 = vsub.s32 %v239, 2
    %vm241 = vcmp.gt.s32.totalorder 0, %v240
    %v242 = vsel %vm241, 0, %v240
    %v243 = vsub.s32 32, %v242
    %v244 = vshll.u32 %v235, %v242
    %v245 = vshrl.u32 %v227, %v243
    %v246 = vor.u32 %v244, %v245
    %v247 = vsub.s32 4294967266, %v242
    %v248 = vadd.s32 %v247, 127
    %v249 = vshll.u32 %v248, 23
    %v250 = vor.u32 4788187, %v249
    %v251 = vand.u32 2147483647, %v250
    %v253 = vcvt.s32.f32 %v246
    %v254 = vmul.f32 %v253, %v251
    %v255 = vxor.u32 %v254, 2147483648
    %v256 = vsel %vm173, %v255, %v254
    %v257 = vsub.s32 4, %v233
    %v258 = vsel %vm173, %v257, %v233
    %v259 = vsel %vm172, %v66, %v256
    %v260 = vsel %vm172, 0, %v258
    %v261 = vcosq.f32.pop %v259
    %v262 = vsinq.f32.pop %v259
    %vm263 = vweird.f32 %v66
    %v264 = vand.u32 %v260, 3
    %vm265 = vcmp.lt.s32.totalorder %v264, 2
    %vm266 = vcmp.eq.s32.totalorder %v264, 0
    %v267 = vxor.u32 %v262, 2147483648
    %v268 = vsel %vm266, %v261, %v267
    %vm269 = vcmp.eq.s32.totalorder %v264, 2
    %v270 = vxor.u32 %v261, 2147483648
    %v271 = vsel %vm269, %v270, %v262
    %v272 = vsel %vm265, %v268, %v271
    %v273 = vsel %vm263, nan, %v272
    %v274 = vsel %vm59, 1, 0
    %vm275 = vcmp.eq.s32.totalorder %v274, 1
    %v276 = vsel %vm275, %v170, %v273
    %277 = vst [vmem:[#allocation5] sm:$0x3] %v276
    // Predicated region
    $region10: #{tpu_custom_call.1} parent=1 // pred_check
      _
    $region11: #{tpu_custom_call.1} parent=1 // pred_check_branch
      %279 = sbr.rel (0) target = $region13
    $region12: #{tpu_custom_call.1} parent=1 // pred_region
      %s281 = ssub.s32 32, 32
      %282 = vsyncadd [#allocation4], %s281
      %s284 = sshll.u32 [#allocation5], 4
      %s285 = int_to_ptr.vmem [resolvable:$true] %s284
      %287 = dma.vmem_to_hbm [thread:$0]  %s285, 32, %s1, [#allocation4]
    $region13: #{tpu_custom_call.1} parent=1 // pred_fallthru
      _
    // Predicated region
    $region14: #{tpu_custom_call.1} parent=1 // pred_check
      _
    $region15: #{tpu_custom_call.1} parent=1 // pred_check_branch
      %289 = sbr.rel (0) target = $region17
    $region16: #{tpu_custom_call.1} parent=1 // pred_region
      %290 = dma.done [#allocation4], 32
    $region17: #{tpu_custom_call.1} parent=1 // pred_fallthru
      _
    %291 = vsyncpa [#allocation3], 1
    %292 = vsyncpa [#allocation4], 1

</llo_original>
